<compile_context>
chip_gen: v5e
topology: v5e:2x2
jax: 0.10.0
libtpu: 0.0.40
codegen_flags: <defaults>
</compile_context>

<pallas_src>
import jax
import jax.numpy as jnp
from jax.experimental import pallas as pl
from jax.experimental.pallas import tpu as pltpu


def mlp_kernel(x_ref, w1_ref, w2_ref, w3r_ref, b_ref, o_ref):
    h1_dim = w1_ref.shape[1]
    h2_dim = w2_ref.shape[1]
    # Packed biases (f32): row 0 = b1, row 1 = b2, row 2 = b3 (all left-aligned in lanes).
    b1 = b_ref[0:1, 0:h1_dim]
    b2 = b_ref[1:2, 0:h2_dim]
    b3 = b_ref[2:3, 0:1]

    # Layer 1: bf16 x bf16 -> f32 accumulate on the MXU; bias + ReLU in f32 on the VPU.
    h1 = jnp.dot(x_ref[...], w1_ref[...], preferred_element_type=jnp.float32) + b1
    h1 = jnp.maximum(h1, 0.0)
    # Layer 2.
    h2 = jnp.dot(h1.astype(jnp.bfloat16), w2_ref[...],
                 preferred_element_type=jnp.float32) + b2
    h2 = jnp.maximum(h2, 0.0)
    # Output layer (width 1): VPU multiply + lane reduction — no N=1 matmul on the MXU.
    o = jnp.sum(h2 * w3r_ref[...], axis=-1, keepdims=True) + b3
    o_ref[...] = o.astype(o_ref.dtype)


def simple_nn_forward(x, params, *, batch_tile=256):
    """x: [B, input_dim] float32. params: w1,b1,w2,b2,w3,b3 with weights stored [in, out]."""
    B, D = x.shape
    w1, b1 = params["w1"], params["b1"]
    w2, b2 = params["w2"], params["b2"]
    w3, b3 = params["w3"], params["b3"]
    h1, h2 = w1.shape[1], w2.shape[1]

    # bf16 matmul operands; accumulation stays f32 inside the kernel.
    xb = x.astype(jnp.bfloat16)
    w1b = w1.astype(jnp.bfloat16)
    w2b = w2.astype(jnp.bfloat16)
    # Final layer as an f32 row used on the VPU.
    w3_row = w3.reshape(1, h2).astype(jnp.float32)

    # Pack the three small biases into one lane-padded f32 array (one DMA instead of three).
    padw = ((max(h1, h2, 1) + 127) // 128) * 128
    b_packed = jnp.zeros((3, padw), jnp.float32)
    b_packed = b_packed.at[0, :h1].set(b1.reshape(-1))
    b_packed = b_packed.at[1, :h2].set(b2.reshape(-1))
    b_packed = b_packed.at[2, :1].set(b3.reshape(-1))

    # Batch tile: fill MXU rows when the batch allows; pad batch so it tiles evenly.
    tb = min(batch_tile, B)
    n_blocks = pl.cdiv(B, tb)
    Bp = n_blocks * tb
    if Bp != B:
        xb = jnp.pad(xb, ((0, Bp - B), (0, 0)))

    out = pl.pallas_call(
        mlp_kernel,
        out_shape=jax.ShapeDtypeStruct((Bp, 1), jnp.float32),
        grid=(n_blocks,),
        in_specs=[
            pl.BlockSpec((tb, D), lambda i: (i, 0)),        # x: tiled over the batch
            pl.BlockSpec(w1b.shape, lambda i: (0, 0)),      # weights: VMEM-resident
            pl.BlockSpec(w2b.shape, lambda i: (0, 0)),
            pl.BlockSpec(w3_row.shape, lambda i: (0, 0)),
            pl.BlockSpec(b_packed.shape, lambda i: (0, 0)),
        ],
        out_specs=pl.BlockSpec((tb, 1), lambda i: (i, 0)),
        compiler_params=pltpu.CompilerParams(
            dimension_semantics=("parallel",)),
    )(xb, w1b, w2b, w3_row, b_packed)
    return out[:B]


def init_params(key, input_dim, hidden_sizes):
    """Deterministic init mimicking nn.Linear's U(-1/sqrt(fan_in), +1/sqrt(fan_in))."""
    dims = [input_dim, hidden_sizes[0], hidden_sizes[1], 1]
    names = [("w1", "b1"), ("w2", "b2"), ("w3", "b3")]
    params = {}
    for (wname, bname), fan_in, fan_out in zip(names, dims[:-1], dims[1:]):
        key, kw, kb = jax.random.split(key, 3)
        bound = 1.0 / jnp.sqrt(jnp.float32(fan_in))
        # stored as [in, out] so the kernel computes x @ W
        params[wname] = jax.random.uniform(kw, (fan_in, fan_out), jnp.float32,
                                           minval=-bound, maxval=bound)
        params[bname] = jax.random.uniform(kb, (1, fan_out), jnp.float32,
                                           minval=-bound, maxval=bound)
    return params


if __name__ == "__main__":
    key = jax.random.PRNGKey(0)
    batch, input_dim, hidden_sizes = 512, 32, (64, 32)

    kx, kp = jax.random.split(key)
    x = jax.random.normal(kx, (batch, input_dim), jnp.float32)
    params = init_params(kp, input_dim, hidden_sizes)

    out = jax.block_until_ready(simple_nn_forward(x, params))
    assert out.shape == (batch, 1), out.shape

    # Reference mirroring the kernel's bf16-in / f32-accumulate numerics.
    def ref_bf16(x, p):
        h1 = jnp.maximum(
            jnp.dot(x.astype(jnp.bfloat16), p["w1"].astype(jnp.bfloat16),
                    preferred_element_type=jnp.float32) + p["b1"], 0.0)
        h2 = jnp.maximum(
            jnp.dot(h1.astype(jnp.bfloat16), p["w2"].astype(jnp.bfloat16),
                    preferred_element_type=jnp.float32) + p["b2"], 0.0)
        return jnp.sum(h2 * p["w3"].reshape(1, -1), axis=-1, keepdims=True) + p["b3"]

    # Full-f32 reference of the original module semantics (loose tolerance: bf16 inputs).
    def ref_f32(x, p):
        h1 = jnp.maximum(x @ p["w1"] + p["b1"], 0.0)
        h2 = jnp.maximum(h1 @ p["w2"] + p["b2"], 0.0)
        return h2 @ p["w3"] + p["b3"]

    assert jnp.allclose(out, ref_bf16(x, params), atol=1e-3, rtol=1e-3), \
        "mismatch vs bf16 reference"
    assert jnp.allclose(out, ref_f32(x, params), atol=3e-2, rtol=3e-2), \
        "mismatch vs f32 reference"
    print("KERNEL_OK")
</pallas_src>

<mosaic_0001>
module attributes {stable_mosaic.version = 11 : i64} {
  func.func @mlp_kernel(%arg0: i32, %arg1: memref<256x32xbf16, #tpu.memory_space<vmem>>, %arg2: memref<32x64xbf16, #tpu.memory_space<vmem>>, %arg3: memref<64x32xbf16, #tpu.memory_space<vmem>>, %arg4: memref<1x32xf32, #tpu.memory_space<vmem>>, %arg5: memref<3x128xf32, #tpu.memory_space<vmem>>, %arg6: memref<256x1xf32, #tpu.memory_space<vmem>>) attributes {dimension_semantics = [#tpu.dimension_semantics<parallel>], iteration_bounds = array<i64: 2>, scalar_prefetch = 0 : i64, scratch_operands = 0 : i64, tpu.core_type = #tpu.core_type<tc>, window_params = [{transform_indices = @transform_0, window_bounds = array<i64: 256, 32>}, {pipeline_mode = #tpu.pipeline_mode<synchronous>, transform_indices = @transform_1, window_bounds = array<i64: 32, 64>}, {pipeline_mode = #tpu.pipeline_mode<synchronous>, transform_indices = @transform_2, window_bounds = array<i64: 64, 32>}, {pipeline_mode = #tpu.pipeline_mode<synchronous>, transform_indices = @transform_3, window_bounds = array<i64: 1, 32>}, {pipeline_mode = #tpu.pipeline_mode<synchronous>, transform_indices = @transform_4, window_bounds = array<i64: 3, 128>}, {transform_indices = @transform_5, window_bounds = array<i64: 256, 1>}]} {
    %c0 = arith.constant 0 : index
    %c0_0 = arith.constant 0 : index
    %0 = vector.load %arg5[%c0, %c0_0] : memref<3x128xf32, #tpu.memory_space<vmem>>, vector<1x64xf32>
    %c1 = arith.constant 1 : index
    %c0_1 = arith.constant 0 : index
    %1 = vector.load %arg5[%c1, %c0_1] : memref<3x128xf32, #tpu.memory_space<vmem>>, vector<1x32xf32>
    %c2 = arith.constant 2 : index
    %c0_2 = arith.constant 0 : index
    %2 = vector.load %arg5[%c2, %c0_2] : memref<3x128xf32, #tpu.memory_space<vmem>>, vector<1x1xf32>
    %c0_3 = arith.constant 0 : index
    %c0_4 = arith.constant 0 : index
    %3 = vector.load %arg1[%c0_3, %c0_4] : memref<256x32xbf16, #tpu.memory_space<vmem>>, vector<256x32xbf16>
    %c0_5 = arith.constant 0 : index
    %c0_6 = arith.constant 0 : index
    %4 = vector.load %arg2[%c0_5, %c0_6] : memref<32x64xbf16, #tpu.memory_space<vmem>>, vector<32x64xbf16>
    %cst = arith.constant dense<0.000000e+00> : vector<256x64xf32>
    %5 = tpu.matmul %3, %4, %cst {dimension_numbers = #tpu.dot_dimension_numbers<[1], [0], [0], [1], [0, 0, 1, 1], [], []>} : vector<256x32xbf16>, vector<32x64xbf16>, vector<256x64xf32> -> vector<256x64xf32>
    %6 = vector.broadcast %0 : vector<1x64xf32> to vector<256x64xf32>
    %7 = arith.addf %5, %6 : vector<256x64xf32>
    %cst_7 = arith.constant 0.000000e+00 : f32
    %8 = vector.broadcast %cst_7 : f32 to vector<256x64xf32>
    %9 = arith.maximumf %7, %8 : vector<256x64xf32>
    %10 = arith.truncf %9 : vector<256x64xf32> to vector<256x64xbf16>
    %c0_8 = arith.constant 0 : index
    %c0_9 = arith.constant 0 : index
    %11 = vector.load %arg3[%c0_8, %c0_9] : memref<64x32xbf16, #tpu.memory_space<vmem>>, vector<64x32xbf16>
    %cst_10 = arith.constant dense<0.000000e+00> : vector<256x32xf32>
    %12 = tpu.matmul %10, %11, %cst_10 {dimension_numbers = #tpu.dot_dimension_numbers<[1], [0], [0], [1], [0, 0, 1, 1], [], []>} : vector<256x64xbf16>, vector<64x32xbf16>, vector<256x32xf32> -> vector<256x32xf32>
    %13 = vector.broadcast %1 : vector<1x32xf32> to vector<256x32xf32>
    %14 = arith.addf %12, %13 : vector<256x32xf32>
    %cst_11 = arith.constant 0.000000e+00 : f32
    %15 = vector.broadcast %cst_11 : f32 to vector<256x32xf32>
    %16 = arith.maximumf %14, %15 : vector<256x32xf32>
    %c0_12 = arith.constant 0 : index
    %c0_13 = arith.constant 0 : index
    %17 = vector.load %arg4[%c0_12, %c0_13] : memref<1x32xf32, #tpu.memory_space<vmem>>, vector<1x32xf32>
    %18 = vector.broadcast %17 : vector<1x32xf32> to vector<256x32xf32>
    %19 = arith.mulf %16, %18 : vector<256x32xf32>
    %cst_14 = arith.constant dense<0.000000e+00> : vector<256xf32>
    %20 = vector.multi_reduction <add>, %19, %cst_14 [1] : vector<256x32xf32> to vector<256xf32>
    %21 = vector.shape_cast %20 : vector<256xf32> to vector<256x1xf32>
    %22 = vector.broadcast %2 : vector<1x1xf32> to vector<256x1xf32>
    %23 = arith.addf %21, %22 : vector<256x1xf32>
    %c0_15 = arith.constant 0 : index
    %c0_16 = arith.constant 0 : index
    %24 = vector.load %arg6[%c0_15, %c0_16] : memref<256x1xf32, #tpu.memory_space<vmem>>, vector<256x1xf32>
    tpu.vector_store %arg6[%c0_15, %c0_16], %23 {strides = array<i32>} : memref<256x1xf32, #tpu.memory_space<vmem>>, vector<256x1xf32>,
    return
  }
  func.func @transform_0(%arg0: i32) -> (i32, i32) {
    %c0_i32 = arith.constant 0 : i32
    %c0_i32_0 = arith.constant 0 : i32
    return %arg0, %c0_i32 : i32, i32
  }
  func.func @transform_1(%arg0: i32) -> (i32, i32) {
    %c0_i32 = arith.constant 0 : i32
    %c0_i32_0 = arith.constant 0 : i32
    %c0_i32_1 = arith.constant 0 : i32
    return %c0_i32, %c0_i32_0 : i32, i32
  }
  func.func @transform_2(%arg0: i32) -> (i32, i32) {
    %c0_i32 = arith.constant 0 : i32
    %c0_i32_0 = arith.constant 0 : i32
    %c0_i32_1 = arith.constant 0 : i32
    return %c0_i32, %c0_i32_0 : i32, i32
  }
  func.func @transform_3(%arg0: i32) -> (i32, i32) {
    %c0_i32 = arith.constant 0 : i32
    %c0_i32_0 = arith.constant 0 : i32
    %c0_i32_1 = arith.constant 0 : i32
    return %c0_i32, %c0_i32_0 : i32, i32
  }
  func.func @transform_4(%arg0: i32) -> (i32, i32) {
    %c0_i32 = arith.constant 0 : i32
    %c0_i32_0 = arith.constant 0 : i32
    %c0_i32_1 = arith.constant 0 : i32
    return %c0_i32, %c0_i32_0 : i32, i32
  }
  func.func @transform_5(%arg0: i32) -> (i32, i32) {
    %c0_i32 = arith.constant 0 : i32
    %c0_i32_0 = arith.constant 0 : i32
    return %arg0, %c0_i32 : i32, i32
  }
}

</mosaic_0001>

<llo_original>
// kernel: tpu_custom_call.1
$region0: #{tpu_custom_call.1}
  #allocation0 [shape = 'u32[]', space=smem, size = 0x4, offset = 0x4, fixed_abs, tag = 'smem constant byte address 0x4 - core index']
  #allocation1 [shape = 'u32[72,128]{1,0:T(1,128)}', space=vmem, size = 0x9000, scoped, tag = 'internal scratch']
  %s0 = inlined_call_operand.vmem [shape: bf16[512,32], index: 0, kind: input, shape index: {}]
  %s1 = inlined_call_operand.vmem [shape: bf16[32,64], index: 1, kind: input, shape index: {}]
  %s2 = inlined_call_operand.vmem [shape: bf16[64,32], index: 2, kind: input, shape index: {}]
  %s3 = inlined_call_operand.vmem [shape: f32[1,32], index: 3, kind: input, shape index: {}]
  %s4 = inlined_call_operand.vmem [shape: f32[3,128], index: 4, kind: input, shape index: {}]
  %s5 = inlined_call_operand.vmem [shape: f32[512,1], index: 5, kind: output, shape index: {}]
  %s6 = sld [smem:[#allocation0]]
  $region53: #{tpu_custom_call.1} parent=0
    _
  %s8 = ssub.s32 1, %s6
  %s9 = scalar_select 0, %s8, %s6
  loop: start=0, step=1, limit=4
  $region2: #{tpu_custom_call.1} parent=0 // loop_pre_header
    _
  $region3: #{tpu_custom_call.1} parent=0 // loop_header
    %s11 = sphi 0, %s15
    %p12 = scmp.ge.s32.totalorder %s11, 4
    %s21 = sphi 0, %s23
    %s24 = sphi 0, %s21
    %s25 = sphi 0, %s24
    %s41 = sphi 0, %s25
    %s45 = sphi 0, %s45
    %s47 = sphi 0, %s45
    %s48 = sphi 0, %s47
    %s62 = sphi 0, %s48
    %s66 = sphi 0, %s66
    %s68 = sphi 0, %s66
    %s69 = sphi 0, %s68
    %s83 = sphi 0, %s69
    %s87 = sphi 0, %s87
    %s89 = sphi 0, %s87
    %s90 = sphi 0, %s89
    %s104 = sphi 0, %s90
    %s108 = sphi 0, %s108
    %s110 = sphi 0, %s108
    %s111 = sphi 0, %s110
    %s125 = sphi 0, %s111
    %s131 = sphi 0, %s133
    %s134 = sphi 0, %s131
    %s135 = sphi 0, %s134
    %s151 = sphi 0, %s135
  $region4: #{tpu_custom_call.1} parent=0 // loop_header_branch
    %14 = sbr.rel (%p12) target = $region8
  $region5: #{tpu_custom_call.1} parent=0 // loop_body
    %s16 = ssub.s32 %s11, 1
    %s17 = ssub.s32 %s11, 2
    %s18 = sadd.s32 %s11, 1
    %s19 = ssub.s32 %s11, %s18
    %p20 = scmp.eq.s32.totalorder %s19, 0
    %s22 = sadd.s32 %s21, 1
    %s23 = scalar_select %p20, %s21, %s22
    %p26 = pneg %p20
    %p27 = scmp.eq.s32.totalorder %s11, 1
    %p28 = por %p26, %p27
    %p29 = scmp.ne.s32.totalorder %s21, %s24
    %p30 = scmp.eq.s32.totalorder %s11, 0
    %p31 = por %p29, %p30
    %p32 = scmp.ne.s32.totalorder %s21, %s24
    %p33 = scmp.eq.s32.totalorder %s16, 1
    %p34 = por %p32, %p33
    %p35 = scmp.ne.s32.totalorder %s24, %s25
    %p36 = scmp.eq.s32.totalorder %s16, 0
    %p37 = por %p35, %p36
    %p38 = scmp.ne.s32.totalorder %s24, %s25
    %p39 = scmp.eq.s32.totalorder %s17, 1
    %p40 = por %p38, %p39
    %p42 = scmp.ne.s32.totalorder %s25, %s41
    %p43 = scmp.eq.s32.totalorder %s17, 0
    %p44 = por %p42, %p43
    %s46 = sadd.s32 %s45, 1
    %p49 = scmp.eq.s32.totalorder %s11, 1
    %p50 = scmp.ne.s32.totalorder %s45, %s47
    %p51 = scmp.eq.s32.totalorder %s11, 0
    %p52 = por %p50, %p51
    %p53 = scmp.ne.s32.totalorder %s45, %s47
    %p54 = scmp.eq.s32.totalorder %s16, 1
    %p55 = por %p53, %p54
    %p56 = scmp.ne.s32.totalorder %s47, %s48
    %p57 = scmp.eq.s32.totalorder %s16, 0
    %p58 = por %p56, %p57
    %p59 = scmp.ne.s32.totalorder %s47, %s48
    %p60 = scmp.eq.s32.totalorder %s17, 1
    %p61 = por %p59, %p60
    %p63 = scmp.ne.s32.totalorder %s48, %s62
    %p64 = scmp.eq.s32.totalorder %s17, 0
    %p65 = por %p63, %p64
    %s67 = sadd.s32 %s66, 1
    %p70 = scmp.eq.s32.totalorder %s11, 1
    %p71 = scmp.ne.s32.totalorder %s66, %s68
    %p72 = scmp.eq.s32.totalorder %s11, 0
    %p73 = por %p71, %p72
    %p74 = scmp.ne.s32.totalorder %s66, %s68
    %p75 = scmp.eq.s32.totalorder %s16, 1
    %p76 = por %p74, %p75
    %p77 = scmp.ne.s32.totalorder %s68, %s69
    %p78 = scmp.eq.s32.totalorder %s16, 0
    %p79 = por %p77, %p78
    %p80 = scmp.ne.s32.totalorder %s68, %s69
    %p81 = scmp.eq.s32.totalorder %s17, 1
    %p82 = por %p80, %p81
    %p84 = scmp.ne.s32.totalorder %s69, %s83
    %p85 = scmp.eq.s32.totalorder %s17, 0
    %p86 = por %p84, %p85
    %s88 = sadd.s32 %s87, 1
    %p91 = scmp.eq.s32.totalorder %s11, 1
    %p92 = scmp.ne.s32.totalorder %s87, %s89
    %p93 = scmp.eq.s32.totalorder %s11, 0
    %p94 = por %p92, %p93
    %p95 = scmp.ne.s32.totalorder %s87, %s89
    %p96 = scmp.eq.s32.totalorder %s16, 1
    %p97 = por %p95, %p96
    %p98 = scmp.ne.s32.totalorder %s89, %s90
    %p99 = scmp.eq.s32.totalorder %s16, 0
    %p100 = por %p98, %p99
    %p101 = scmp.ne.s32.totalorder %s89, %s90
    %p102 = scmp.eq.s32.totalorder %s17, 1
    %p103 = por %p101, %p102
    %p105 = scmp.ne.s32.totalorder %s90, %s104
    %p106 = scmp.eq.s32.totalorder %s17, 0
    %p107 = por %p105, %p106
    %s109 = sadd.s32 %s108, 1
    %p112 = scmp.eq.s32.totalorder %s11, 1
    %p113 = scmp.ne.s32.totalorder %s108, %s110
    %p114 = scmp.eq.s32.totalorder %s11, 0
    %p115 = por %p113, %p114
    %p116 = scmp.ne.s32.totalorder %s108, %s110
    %p117 = scmp.eq.s32.totalorder %s16, 1
    %p118 = por %p116, %p117
    %p119 = scmp.ne.s32.totalorder %s110, %s111
    %p120 = scmp.eq.s32.totalorder %s16, 0
    %p121 = por %p119, %p120
    %p122 = scmp.ne.s32.totalorder %s110, %s111
    %p123 = scmp.eq.s32.totalorder %s17, 1
    %p124 = por %p122, %p123
    %p126 = scmp.ne.s32.totalorder %s111, %s125
    %p127 = scmp.eq.s32.totalorder %s17, 0
    %p128 = por %p126, %p127
    %s129 = ssub.s32 %s11, %s18
    %p130 = scmp.eq.s32.totalorder %s129, 0
    %s132 = sadd.s32 %s131, 1
    %s133 = scalar_select %p130, %s131, %s132
    %p136 = pneg %p130
    %p137 = scmp.eq.s32.totalorder %s11, 1
    %p138 = por %p136, %p137
    %p139 = scmp.ne.s32.totalorder %s131, %s134
    %p140 = scmp.eq.s32.totalorder %s11, 0
    %p141 = por %p139, %p140
    %p142 = scmp.ne.s32.totalorder %s131, %s134
    %p143 = scmp.eq.s32.totalorder %s16, 1
    %p144 = por %p142, %p143
    %p145 = scmp.ne.s32.totalorder %s134, %s135
    %p146 = scmp.eq.s32.totalorder %s16, 0
    %p147 = por %p145, %p146
    %p148 = scmp.ne.s32.totalorder %s134, %s135
    %p149 = scmp.eq.s32.totalorder %s17, 1
    %p150 = por %p148, %p149
    %p152 = scmp.ne.s32.totalorder %s135, %s151
    %p153 = scmp.eq.s32.totalorder %s17, 0
    %p154 = por %p152, %p153
    %p155 = scmp.le.s32.totalorder 1, %s11
    %p156 = scmp.lt.s32.totalorder %s11, 3
    %p157 = pnand %p155, %p156
    %p158 = pneg %p157
    // Predicated region
    $region9: #{tpu_custom_call.1} parent=5 // pred_check
      _
    $region10: #{tpu_custom_call.1} parent=5 // pred_check_branch
      %160 = sbr.rel (%p157) target = $region12
    $region11: #{tpu_custom_call.1} parent=5 // pred_region
      %s161 = ssub.s32 %s11, 1
      // Predicated region
      $region13: #{tpu_custom_call.1} parent=11 // pred_check
        %p162 = pneg %p58
      $region14: #{tpu_custom_call.1} parent=11 // pred_check_branch
        %164 = sbr.rel (%p162) target = $region16
      $region15: #{tpu_custom_call.1} parent=11 // pred_region
        _
      $region16: #{tpu_custom_call.1} parent=11 // pred_fallthru
        _
      // Predicated region
      $region17: #{tpu_custom_call.1} parent=11 // pred_check
        %p165 = pneg %p79
      $region18: #{tpu_custom_call.1} parent=11 // pred_check_branch
        %167 = sbr.rel (%p165) target = $region20
      $region19: #{tpu_custom_call.1} parent=11 // pred_region
        _
      $region20: #{tpu_custom_call.1} parent=11 // pred_fallthru
        _
      // Predicated region
      $region21: #{tpu_custom_call.1} parent=11 // pred_check
        %p168 = pneg %p100
      $region22: #{tpu_custom_call.1} parent=11 // pred_check_branch
        %170 = sbr.rel (%p168) target = $region24
      $region23: #{tpu_custom_call.1} parent=11 // pred_region
        _
      $region24: #{tpu_custom_call.1} parent=11 // pred_fallthru
        _
      // Predicated region
      $region25: #{tpu_custom_call.1} parent=11 // pred_check
        %p171 = pneg %p121
      $region26: #{tpu_custom_call.1} parent=11 // pred_check_branch
        %173 = sbr.rel (%p171) target = $region28
      $region27: #{tpu_custom_call.1} parent=11 // pred_region
        _
      $region28: #{tpu_custom_call.1} parent=11 // pred_fallthru
        _
    $region12: #{tpu_custom_call.1} parent=5 // pred_fallthru
      _
    %p174 = scmp.lt.s32.totalorder %s11, 2
    // Predicated region
    $region29: #{tpu_custom_call.1} parent=5 // pred_check
      %p175 = pneg %p174
    $region30: #{tpu_custom_call.1} parent=5 // pred_check_branch
      %177 = sbr.rel (%p175) target = $region32
    $region31: #{tpu_custom_call.1} parent=5 // pred_region
      // Predicated region
      $region33: #{tpu_custom_call.1} parent=31 // pred_check
        %p178 = pneg %p31
      $region34: #{tpu_custom_call.1} parent=31 // pred_check_branch
        %180 = sbr.rel (%p178) target = $region36
      $region35: #{tpu_custom_call.1} parent=31 // pred_region
        %s181 = smul.u32 32, %s11
        %p182 = scmp.lt.s32.totalorder %s181, 63
        %s183 = scalar_select %p182, %s181, 63
        %s184 = smul.addr %s183, 4
        %s185 = scalar_lea.vmem %s0, %s184
        %s186 = smul.u32 32, %s11
      $region36: #{tpu_custom_call.1} parent=31 // pred_fallthru
        _
    $region32: #{tpu_custom_call.1} parent=5 // pred_fallthru
      _
    %p187 = scmp.le.s32.totalorder 1, %s11
    %p188 = scmp.lt.s32.totalorder %s11, 3
    %p189 = pnand %p187, %p188
    %p190 = pneg %p189
    // Predicated region
    $region37: #{tpu_custom_call.1} parent=5 // pred_check
      _
    $region38: #{tpu_custom_call.1} parent=5 // pred_check_branch
      %192 = sbr.rel (%p189) target = $region40
    $region39: #{tpu_custom_call.1} parent=5 // pred_region
      %s193 = ssub.s32 %s11, 1
      %s194 = smul.u32 32, %s16
      %p195 = scmp.lt.s32.totalorder %s194, 63
      %s196 = scalar_select %p195, %s194, 63
      %s197 = smul.addr %s196, 4
      %s198 = scalar_lea.vmem %s0, %s197
      %p199 = pneg %p37
      %p200 = pneg %p34
      %p201 = pneg %p58
      %p202 = pneg %p55
      %p203 = pneg %p79
      %p204 = pneg %p76
      %p205 = pneg %p100
      %p206 = pneg %p97
      %p207 = pneg %p121
      %p208 = pneg %p118
      %p209 = pneg %p147
      %p210 = pneg %p144
      %s211 = smul.u32 32, %s16
      %p212 = scmp.lt.s32.totalorder %s211, 63
      %s213 = scalar_select %p212, %s211, 63
      %s214 = smul.addr %s213, 8
      %s215 = scalar_lea.vmem %s5, %s214
      %s216 = smul.u32 32, %s16
      %p217 = scmp.lt.s32.totalorder %s216, 63
      %s218 = scalar_select %p217, %s216, 63
      %s219 = smul.addr %s218, 4
      %s220 = scalar_lea.vmem %s0, %s219
      %s221 = smul.u32 32, %s16
      %s222 = smul.u32 32, %s16
      %p223 = scmp.lt.s32.totalorder %s222, 63
      %s224 = scalar_select %p223, %s222, 63
      %s225 = smul.addr %s224, 8
      %s226 = scalar_lea.vmem %s5, %s225
      %s227 = smul.u32 32, %s16
      %v229 = vld [vmem:[%s4] sm:$0x1]
      %v230 = vld [vmem:[%s4 + $0x1] sm:$0x1]
      %v231 = vld [vmem:[%s4 + $0x2] sm:$0x1]
      %v232 = vld [vmem:[%s220] sm:$0xf]
      %v233 = vld [vmem:[%s220 + $0x4] sm:$0xf]
      %v234 = vld [vmem:[%s220 + $0x8] sm:$0xf]
      %v235 = vld [vmem:[%s220 + $0xc] sm:$0xf]
      %v236 = vld [vmem:[%s220 + $0x10] sm:$0xf]
      %v237 = vld [vmem:[%s220 + $0x14] sm:$0xf]
      %v238 = vld [vmem:[%s220 + $0x18] sm:$0xf]
      %v239 = vld [vmem:[%s220 + $0x1c] sm:$0xf]
      %v240 = vld [vmem:[%s220 + $0x20] sm:$0xf]
      %v241 = vld [vmem:[%s220 + $0x24] sm:$0xf]
      %v242 = vld [vmem:[%s220 + $0x28] sm:$0xf]
      %v243 = vld [vmem:[%s220 + $0x2c] sm:$0xf]
      %v244 = vld [vmem:[%s220 + $0x30] sm:$0xf]
      %v245 = vld [vmem:[%s220 + $0x34] sm:$0xf]
      %v246 = vld [vmem:[%s220 + $0x38] sm:$0xf]
      %v247 = vld [vmem:[%s220 + $0x3c] sm:$0xf]
      %v248 = vld [vmem:[%s220 + $0x40] sm:$0xf]
      %v249 = vld [vmem:[%s220 + $0x44] sm:$0xf]
      %v250 = vld [vmem:[%s220 + $0x48] sm:$0xf]
      %v251 = vld [vmem:[%s220 + $0x4c] sm:$0xf]
      %v252 = vld [vmem:[%s220 + $0x50] sm:$0xf]
      %v253 = vld [vmem:[%s220 + $0x54] sm:$0xf]
      %v254 = vld [vmem:[%s220 + $0x58] sm:$0xf]
      %v255 = vld [vmem:[%s220 + $0x5c] sm:$0xf]
      %v256 = vld [vmem:[%s220 + $0x60] sm:$0xf]
      %v257 = vld [vmem:[%s220 + $0x64] sm:$0xf]
      %v258 = vld [vmem:[%s220 + $0x68] sm:$0xf]
      %v259 = vld [vmem:[%s220 + $0x6c] sm:$0xf]
      %v260 = vld [vmem:[%s220 + $0x70] sm:$0xf]
      %v261 = vld [vmem:[%s220 + $0x74] sm:$0xf]
      %v262 = vld [vmem:[%s220 + $0x78] sm:$0xf]
      %v263 = vld [vmem:[%s220 + $0x7c] sm:$0xf]
      %v264 = vld [vmem:[%s1] sm:$0xf]
      %v265 = vld [vmem:[%s1 + $0x4] sm:$0xf]
      %v266 = vld [vmem:[%s1 + $0x8] sm:$0xf]
      %v267 = vld [vmem:[%s1 + $0xc] sm:$0xf]
      %v268 = vperm.slane %v229, 0
      %v301 = vunpack.c.l.b16 %v232
      %v302 = vunpack.c.l.b16 %v233
      %v303 = vunpack.c.l.b16 %v234
      %v304 = vunpack.c.l.b16 %v235
      %v305 = vunpack.c.l.b16 %v236
      %v306 = vunpack.c.l.b16 %v237
      %v307 = vunpack.c.l.b16 %v238
      %v308 = vunpack.c.l.b16 %v239
      %v309 = vunpack.c.l.b16 %v240
      %v310 = vunpack.c.l.b16 %v241
      %v311 = vunpack.c.l.b16 %v242
      %v312 = vunpack.c.l.b16 %v243
      %v313 = vunpack.c.l.b16 %v244
      %v314 = vunpack.c.l.b16 %v245
      %v315 = vunpack.c.l.b16 %v246
      %v316 = vunpack.c.l.b16 %v247
      %v317 = vunpack.c.l.b16 %v248
      %v318 = vunpack.c.l.b16 %v249
      %v319 = vunpack.c.l.b16 %v250
      %v320 = vunpack.c.l.b16 %v251
      %v321 = vunpack.c.l.b16 %v252
      %v322 = vunpack.c.l.b16 %v253
      %v323 = vunpack.c.l.b16 %v254
      %v324 = vunpack.c.l.b16 %v255
      %v325 = vunpack.c.l.b16 %v256
      %v326 = vunpack.c.l.b16 %v257
      %v327 = vunpack.c.l.b16 %v258
      %v328 = vunpack.c.l.b16 %v259
      %v329 = vunpack.c.l.b16 %v260
      %v330 = vunpack.c.l.b16 %v261
      %v331 = vunpack.c.l.b16 %v262
      %v332 = vunpack.c.l.b16 %v263
      %v333 = vpack.c.b16 %v302, %v301
      %v334 = vpack.c.b16 %v304, %v303
      %v335 = vpack.c.b16 %v306, %v305
      %v336 = vpack.c.b16 %v308, %v307
      %v337 = vpack.c.b16 %v310, %v309
      %v338 = vpack.c.b16 %v312, %v311
      %v339 = vpack.c.b16 %v314, %v313
      %v340 = vpack.c.b16 %v316, %v315
      %v341 = vpack.c.b16 %v318, %v317
      %v342 = vpack.c.b16 %v320, %v319
      %v343 = vpack.c.b16 %v322, %v321
      %v344 = vpack.c.b16 %v324, %v323
      %v345 = vpack.c.b16 %v326, %v325
      %v346 = vpack.c.b16 %v328, %v327
      %v347 = vpack.c.b16 %v330, %v329
      %v348 = vpack.c.b16 %v332, %v331
      %v353 = vunpack.c.l.b16 %v264
      %v354 = vunpack.c.l.b16 %v265
      %v355 = vunpack.c.l.b16 %v266
      %v356 = vunpack.c.l.b16 %v267
      %v357 = vpack.c.b16 %v354, %v353
      %v358 = vpack.c.b16 %v356, %v355
      %vm361 = vcmask 261120
      %v363 = vsel %vm361, %v333, 0
      %v366 = vsel %vm361, %v334, 0
      %v369 = vsel %vm361, %v335, 0
      %v372 = vsel %vm361, %v336, 0
      %v375 = vsel %vm361, %v337, 0
      %v378 = vsel %vm361, %v338, 0
      %v381 = vsel %vm361, %v339, 0
      %v384 = vsel %vm361, %v340, 0
      %v387 = vsel %vm361, %v341, 0
      %v390 = vsel %vm361, %v342, 0
      %v393 = vsel %vm361, %v343, 0
      %v396 = vsel %vm361, %v344, 0
      %v399 = vsel %vm361, %v345, 0
      %v402 = vsel %vm361, %v346, 0
      %v405 = vsel %vm361, %v347, 0
      %v408 = vsel %vm361, %v348, 0
      %410 = vmatpush.bf16.msra.mxu0 0
      %411 = vmatpush.bf16.msra.mxu0 0
      %412 = vmatpush.bf16.msra.mxu0 0
      %413 = vmatpush.bf16.msra.mxu0 0
      %414 = vmatpush.bf16.msra.mxu0 0
      %415 = vmatpush.bf16.msra.mxu0 0
      %416 = vmatpush.bf16.msra.mxu0 %v358
      %417 = vmatpush.bf16.msra.mxu0 %v357
      %418 = vmatmul.bf16.gmra.mxu0 %v363
      %v419 = vpop.f32.mrf.mxu0
      %v420 = vadd.f32 %v268, %v419
      %v421 = vpop.f32.mrf.mxu0
      %v422 = vadd.f32 %v268, %v421
      %423 = vmatmul.bf16.gmra.mxu0 %v366
      %v424 = vpop.f32.mrf.mxu0
      %v425 = vadd.f32 %v268, %v424
      %v426 = vpop.f32.mrf.mxu0
      %v427 = vadd.f32 %v268, %v426
      %428 = vmatmul.bf16.gmra.mxu0 %v369
      %v429 = vpop.f32.mrf.mxu0
      %v430 = vadd.f32 %v268, %v429
      %v431 = vpop.f32.mrf.mxu0
      %v432 = vadd.f32 %v268, %v431
      %433 = vmatmul.bf16.gmra.mxu0 %v372
      %v434 = vpop.f32.mrf.mxu0
      %v435 = vadd.f32 %v268, %v434
      %v436 = vpop.f32.mrf.mxu0
      %v437 = vadd.f32 %v268, %v436
      %438 = vmatmul.bf16.gmra.mxu0 %v375
      %v439 = vpop.f32.mrf.mxu0
      %v440 = vadd.f32 %v268, %v439
      %v441 = vpop.f32.mrf.mxu0
      %v442 = vadd.f32 %v268, %v441
      %443 = vmatmul.bf16.gmra.mxu0 %v378
      %v444 = vpop.f32.mrf.mxu0
      %v445 = vadd.f32 %v268, %v444
      %v446 = vpop.f32.mrf.mxu0
      %v447 = vadd.f32 %v268, %v446
      %448 = vmatmul.bf16.gmra.mxu0 %v381
      %v449 = vpop.f32.mrf.mxu0
      %v450 = vadd.f32 %v268, %v449
      %v451 = vpop.f32.mrf.mxu0
      %v452 = vadd.f32 %v268, %v451
      %453 = vmatmul.bf16.gmra.mxu0 %v384
      %v454 = vpop.f32.mrf.mxu0
      %v455 = vadd.f32 %v268, %v454
      %v456 = vpop.f32.mrf.mxu0
      %v457 = vadd.f32 %v268, %v456
      %458 = vmatmul.bf16.gmra.mxu0 %v387
      %v459 = vpop.f32.mrf.mxu0
      %v460 = vadd.f32 %v268, %v459
      %v461 = vpop.f32.mrf.mxu0
      %v462 = vadd.f32 %v268, %v461
      %463 = vmatmul.bf16.gmra.mxu0 %v390
      %v464 = vpop.f32.mrf.mxu0
      %v465 = vadd.f32 %v268, %v464
      %v466 = vpop.f32.mrf.mxu0
      %v467 = vadd.f32 %v268, %v466
      %468 = vmatmul.bf16.gmra.mxu0 %v393
      %v469 = vpop.f32.mrf.mxu0
      %v470 = vadd.f32 %v268, %v469
      %v471 = vpop.f32.mrf.mxu0
      %v472 = vadd.f32 %v268, %v471
      %473 = vmatmul.bf16.gmra.mxu0 %v396
      %v474 = vpop.f32.mrf.mxu0
      %v475 = vadd.f32 %v268, %v474
      %v476 = vpop.f32.mrf.mxu0
      %v477 = vadd.f32 %v268, %v476
      %478 = vmatmul.bf16.gmra.mxu0 %v399
      %v479 = vpop.f32.mrf.mxu0
      %v480 = vadd.f32 %v268, %v479
      %v481 = vpop.f32.mrf.mxu0
      %v482 = vadd.f32 %v268, %v481
      %483 = vmatmul.bf16.gmra.mxu0 %v402
      %v484 = vpop.f32.mrf.mxu0
      %v485 = vadd.f32 %v268, %v484
      %v486 = vpop.f32.mrf.mxu0
      %v487 = vadd.f32 %v268, %v486
      %488 = vmatmul.bf16.gmra.mxu0 %v405
      %v489 = vpop.f32.mrf.mxu0
      %v490 = vadd.f32 %v268, %v489
      %v491 = vpop.f32.mrf.mxu0
      %v492 = vadd.f32 %v268, %v491
      %493 = vmatmul.bf16.gmra.mxu0 %v408
      %v494 = vpop.f32.mrf.mxu0
      %v495 = vadd.f32 %v268, %v494
      %v496 = vpop.f32.mrf.mxu0
      %v497 = vadd.f32 %v268, %v496
      %498 = vdwg.mxu0
      %v499 = vmax.f32 %v420, 0.0
      %v500 = vmax.f32 %v422, 0.0
      %v501 = vmax.f32 %v425, 0.0
      %v502 = vmax.f32 %v427, 0.0
      %v503 = vmax.f32 %v430, 0.0
      %v504 = vmax.f32 %v432, 0.0
      %v505 = vmax.f32 %v435, 0.0
      %v506 = vmax.f32 %v437, 0.0
      %v507 = vmax.f32 %v440, 0.0
      %v508 = vmax.f32 %v442, 0.0
      %v509 = vmax.f32 %v445, 0.0
      %v510 = vmax.f32 %v447, 0.0
      %v511 = vmax.f32 %v450, 0.0
      %v512 = vmax.f32 %v452, 0.0
      %v513 = vmax.f32 %v455, 0.0
      %v514 = vmax.f32 %v457, 0.0
      %v515 = vmax.f32 %v460, 0.0
      %v516 = vmax.f32 %v462, 0.0
      %v517 = vmax.f32 %v465, 0.0
      %v518 = vmax.f32 %v467, 0.0
      %v519 = vmax.f32 %v470, 0.0
      %v520 = vmax.f32 %v472, 0.0
      %v521 = vmax.f32 %v475, 0.0
      %v522 = vmax.f32 %v477, 0.0
      %v523 = vmax.f32 %v480, 0.0
      %v524 = vmax.f32 %v482, 0.0
      %v525 = vmax.f32 %v485, 0.0
      %v526 = vmax.f32 %v487, 0.0
      %v527 = vmax.f32 %v490, 0.0
      %v528 = vmax.f32 %v492, 0.0
      %v529 = vmax.f32 %v495, 0.0
      %v530 = vmax.f32 %v497, 0.0
      %v531 = vpack.c.bf16 %v500, %v499
      %v532 = vpack.c.bf16 %v502, %v501
      %v533 = vpack.c.bf16 %v504, %v503
      %v534 = vpack.c.bf16 %v506, %v505
      %v535 = vpack.c.bf16 %v508, %v507
      %v536 = vpack.c.bf16 %v510, %v509
      %v537 = vpack.c.bf16 %v512, %v511
      %v538 = vpack.c.bf16 %v514, %v513
      %v539 = vpack.c.bf16 %v516, %v515
      %v540 = vpack.c.bf16 %v518, %v517
      %v541 = vpack.c.bf16 %v520, %v519
      %v542 = vpack.c.bf16 %v522, %v521
      %v543 = vpack.c.bf16 %v524, %v523
      %v544 = vpack.c.bf16 %v526, %v525
      %v545 = vpack.c.bf16 %v528, %v527
      %v546 = vpack.c.bf16 %v530, %v529
      %v547 = vld [vmem:[%s2] sm:$0xf]
      %v548 = vld [vmem:[%s2 + $0x4] sm:$0xf]
      %v549 = vld [vmem:[%s2 + $0x8] sm:$0xf]
      %v550 = vld [vmem:[%s2 + $0xc] sm:$0xf]
      %v551 = vld [vmem:[%s2 + $0x10] sm:$0xf]
      %v552 = vld [vmem:[%s2 + $0x14] sm:$0xf]
      %v553 = vld [vmem:[%s2 + $0x18] sm:$0xf]
      %v554 = vld [vmem:[%s2 + $0x1c] sm:$0xf]
      %v555 = vperm.slane %v230, 0
      %v564 = vunpack.c.l.b16 %v547
      %v565 = vunpack.c.l.b16 %v548
      %v566 = vunpack.c.l.b16 %v549
      %v567 = vunpack.c.l.b16 %v550
      %v568 = vunpack.c.l.b16 %v551
      %v569 = vunpack.c.l.b16 %v552
      %v570 = vunpack.c.l.b16 %v553
      %v571 = vunpack.c.l.b16 %v554
      %v572 = vpack.c.b16 %v565, %v564
      %v573 = vpack.c.b16 %v567, %v566
      %v574 = vpack.c.b16 %v569, %v568
      %v575 = vpack.c.b16 %v571, %v570
      %vm580 = vcmask 523264
      %v582 = vsel %vm580, %v531, 0
      %v585 = vsel %vm580, %v532, 0
      %v588 = vsel %vm580, %v533, 0
      %v591 = vsel %vm580, %v534, 0
      %v594 = vsel %vm580, %v535, 0
      %v597 = vsel %vm580, %v536, 0
      %v600 = vsel %vm580, %v537, 0
      %v603 = vsel %vm580, %v538, 0
      %v606 = vsel %vm580, %v539, 0
      %v609 = vsel %vm580, %v540, 0
      %v612 = vsel %vm580, %v541, 0
      %v615 = vsel %vm580, %v542, 0
      %v618 = vsel %vm580, %v543, 0
      %v621 = vsel %vm580, %v544, 0
      %v624 = vsel %vm580, %v545, 0
      %v627 = vsel %vm580, %v546, 0
      %629 = vmatpush.bf16.msra.mxu0 0
      %630 = vmatpush.bf16.msra.mxu0 0
      %631 = vmatpush.bf16.msra.mxu0 0
      %632 = vmatpush.bf16.msra.mxu0 0
      %633 = vmatpush.bf16.msra.mxu0 %v575
      %634 = vmatpush.bf16.msra.mxu0 %v574
      %635 = vmatpush.bf16.msra.mxu0 %v573
      %636 = vmatpush.bf16.msra.mxu0 %v572
      %637 = vmatmul.bf16.gmra.mxu0 %v582
      %v638 = vpop.f32.mrf.mxu0
      %v639 = vadd.f32 %v555, %v638
      %v640 = vpop.f32.mrf.mxu0
      %v641 = vadd.f32 %v555, %v640
      %642 = vmatmul.bf16.gmra.mxu0 %v585
      %v643 = vpop.f32.mrf.mxu0
      %v644 = vadd.f32 %v555, %v643
      %v645 = vpop.f32.mrf.mxu0
      %v646 = vadd.f32 %v555, %v645
      %647 = vmatmul.bf16.gmra.mxu0 %v588
      %v648 = vpop.f32.mrf.mxu0
      %v649 = vadd.f32 %v555, %v648
      %v650 = vpop.f32.mrf.mxu0
      %v651 = vadd.f32 %v555, %v650
      %652 = vmatmul.bf16.gmra.mxu0 %v591
      %v653 = vpop.f32.mrf.mxu0
      %v654 = vadd.f32 %v555, %v653
      %v655 = vpop.f32.mrf.mxu0
      %v656 = vadd.f32 %v555, %v655
      %657 = vmatmul.bf16.gmra.mxu0 %v594
      %v658 = vpop.f32.mrf.mxu0
      %v659 = vadd.f32 %v555, %v658
      %v660 = vpop.f32.mrf.mxu0
      %v661 = vadd.f32 %v555, %v660
      %662 = vmatmul.bf16.gmra.mxu0 %v597
      %v663 = vpop.f32.mrf.mxu0
      %v664 = vadd.f32 %v555, %v663
      %v665 = vpop.f32.mrf.mxu0
      %v666 = vadd.f32 %v555, %v665
      %667 = vmatmul.bf16.gmra.mxu0 %v600
      %v668 = vpop.f32.mrf.mxu0
      %v669 = vadd.f32 %v555, %v668
      %v670 = vpop.f32.mrf.mxu0
      %v671 = vadd.f32 %v555, %v670
      %672 = vmatmul.bf16.gmra.mxu0 %v603
      %v673 = vpop.f32.mrf.mxu0
      %v674 = vadd.f32 %v555, %v673
      %v675 = vpop.f32.mrf.mxu0
      %v676 = vadd.f32 %v555, %v675
      %677 = vmatmul.bf16.gmra.mxu0 %v606
      %v678 = vpop.f32.mrf.mxu0
      %v679 = vadd.f32 %v555, %v678
      %v680 = vpop.f32.mrf.mxu0
      %v681 = vadd.f32 %v555, %v680
      %682 = vmatmul.bf16.gmra.mxu0 %v609
      %v683 = vpop.f32.mrf.mxu0
      %v684 = vadd.f32 %v555, %v683
      %v685 = vpop.f32.mrf.mxu0
      %v686 = vadd.f32 %v555, %v685
      %687 = vmatmul.bf16.gmra.mxu0 %v612
      %v688 = vpop.f32.mrf.mxu0
      %v689 = vadd.f32 %v555, %v688
      %v690 = vpop.f32.mrf.mxu0
      %v691 = vadd.f32 %v555, %v690
      %692 = vmatmul.bf16.gmra.mxu0 %v615
      %v693 = vpop.f32.mrf.mxu0
      %v694 = vadd.f32 %v555, %v693
      %v695 = vpop.f32.mrf.mxu0
      %v696 = vadd.f32 %v555, %v695
      %697 = vmatmul.bf16.gmra.mxu0 %v618
      %v698 = vpop.f32.mrf.mxu0
      %v699 = vadd.f32 %v555, %v698
      %v700 = vpop.f32.mrf.mxu0
      %v701 = vadd.f32 %v555, %v700
      %702 = vmatmul.bf16.gmra.mxu0 %v621
      %v703 = vpop.f32.mrf.mxu0
      %v704 = vadd.f32 %v555, %v703
      %v705 = vpop.f32.mrf.mxu0
      %v706 = vadd.f32 %v555, %v705
      %707 = vmatmul.bf16.gmra.mxu0 %v624
      %v708 = vpop.f32.mrf.mxu0
      %v709 = vadd.f32 %v555, %v708
      %v710 = vpop.f32.mrf.mxu0
      %v711 = vadd.f32 %v555, %v710
      %712 = vmatmul.bf16.gmra.mxu0 %v627
      %v713 = vpop.f32.mrf.mxu0
      %v714 = vadd.f32 %v555, %v713
      %v715 = vpop.f32.mrf.mxu0
      %v716 = vadd.f32 %v555, %v715
      %717 = vdwg.mxu0
      %v718 = vmax.f32 %v639, 0.0
      %v719 = vmax.f32 %v641, 0.0
      %v720 = vmax.f32 %v644, 0.0
      %v721 = vmax.f32 %v646, 0.0
      %v722 = vmax.f32 %v649, 0.0
      %v723 = vmax.f32 %v651, 0.0
      %v724 = vmax.f32 %v654, 0.0
      %v725 = vmax.f32 %v656, 0.0
      %v726 = vmax.f32 %v659, 0.0
      %v727 = vmax.f32 %v661, 0.0
      %v728 = vmax.f32 %v664, 0.0
      %v729 = vmax.f32 %v666, 0.0
      %v730 = vmax.f32 %v669, 0.0
      %v731 = vmax.f32 %v671, 0.0
      %v732 = vmax.f32 %v674, 0.0
      %v733 = vmax.f32 %v676, 0.0
      %v734 = vmax.f32 %v679, 0.0
      %v735 = vmax.f32 %v681, 0.0
      %v736 = vmax.f32 %v684, 0.0
      %v737 = vmax.f32 %v686, 0.0
      %v738 = vmax.f32 %v689, 0.0
      %v739 = vmax.f32 %v691, 0.0
      %v740 = vmax.f32 %v694, 0.0
      %v741 = vmax.f32 %v696, 0.0
      %v742 = vmax.f32 %v699, 0.0
      %v743 = vmax.f32 %v701, 0.0
      %v744 = vmax.f32 %v704, 0.0
      %v745 = vmax.f32 %v706, 0.0
      %v746 = vmax.f32 %v709, 0.0
      %v747 = vmax.f32 %v711, 0.0
      %v748 = vmax.f32 %v714, 0.0
      %v749 = vmax.f32 %v716, 0.0
      %v750 = vld [vmem:[%s3] sm:$0x1]
      %v752 = vperm.slane %v750, 0
      %v754 = vmul.f32 %v718, %v752
      %v755 = vmul.f32 %v719, %v752
      %v756 = vmul.f32 %v720, %v752
      %v757 = vmul.f32 %v721, %v752
      %v758 = vmul.f32 %v722, %v752
      %v759 = vmul.f32 %v723, %v752
      %v760 = vmul.f32 %v724, %v752
      %v761 = vmul.f32 %v725, %v752
      %v762 = vmul.f32 %v726, %v752
      %v763 = vmul.f32 %v727, %v752
      %v764 = vmul.f32 %v728, %v752
      %v765 = vmul.f32 %v729, %v752
      %v766 = vmul.f32 %v730, %v752
      %v767 = vmul.f32 %v731, %v752
      %v768 = vmul.f32 %v732, %v752
      %v769 = vmul.f32 %v733, %v752
      %v770 = vmul.f32 %v734, %v752
      %v771 = vmul.f32 %v735, %v752
      %v772 = vmul.f32 %v736, %v752
      %v773 = vmul.f32 %v737, %v752
      %v774 = vmul.f32 %v738, %v752
      %v775 = vmul.f32 %v739, %v752
      %v776 = vmul.f32 %v740, %v752
      %v777 = vmul.f32 %v741, %v752
      %v778 = vmul.f32 %v742, %v752
      %v779 = vmul.f32 %v743, %v752
      %v780 = vmul.f32 %v744, %v752
      %v781 = vmul.f32 %v745, %v752
      %v782 = vmul.f32 %v746, %v752
      %v783 = vmul.f32 %v747, %v752
      %v784 = vmul.f32 %v748, %v752
      %v785 = vmul.f32 %v749, %v752
      %v786 = vsel %vm361, %v754, 0.0
      %787 = vadd.xlane.f32.xlu0 %v786
      %v788 = vpop.xlane.xlu0 %787
      %v789 = vsel %vm361, %v755, 0.0
      %790 = vadd.xlane.f32.xlu0 %v789
      %v791 = vpop.xlane.xlu0 %790
      %v792 = vsel %vm361, %v756, 0.0
      %793 = vadd.xlane.f32.xlu0 %v792
      %v794 = vpop.xlane.xlu0 %793
      %v795 = vsel %vm361, %v757, 0.0
      %796 = vadd.xlane.f32.xlu0 %v795
      %v797 = vpop.xlane.xlu0 %796
      %v798 = vsel %vm361, %v758, 0.0
      %799 = vadd.xlane.f32.xlu0 %v798
      %v800 = vpop.xlane.xlu0 %799
      %v801 = vsel %vm361, %v759, 0.0
      %802 = vadd.xlane.f32.xlu0 %v801
      %v803 = vpop.xlane.xlu0 %802
      %v804 = vsel %vm361, %v760, 0.0
      %805 = vadd.xlane.f32.xlu0 %v804
      %v806 = vpop.xlane.xlu0 %805
      %v807 = vsel %vm361, %v761, 0.0
      %808 = vadd.xlane.f32.xlu0 %v807
      %v809 = vpop.xlane.xlu0 %808
      %v810 = vsel %vm361, %v762, 0.0
      %811 = vadd.xlane.f32.xlu0 %v810
      %v812 = vpop.xlane.xlu0 %811
      %v813 = vsel %vm361, %v763, 0.0
      %814 = vadd.xlane.f32.xlu0 %v813
      %v815 = vpop.xlane.xlu0 %814
      %v816 = vsel %vm361, %v764, 0.0
      %817 = vadd.xlane.f32.xlu0 %v816
      %v818 = vpop.xlane.xlu0 %817
      %v819 = vsel %vm361, %v765, 0.0
      %820 = vadd.xlane.f32.xlu0 %v819
      %v821 = vpop.xlane.xlu0 %820
      %v822 = vsel %vm361, %v766, 0.0
      %823 = vadd.xlane.f32.xlu0 %v822
      %v824 = vpop.xlane.xlu0 %823
      %v825 = vsel %vm361, %v767, 0.0
      %826 = vadd.xlane.f32.xlu0 %v825
      %v827 = vpop.xlane.xlu0 %826
      %v828 = vsel %vm361, %v768, 0.0
      %829 = vadd.xlane.f32.xlu0 %v828
      %v830 = vpop.xlane.xlu0 %829
      %v831 = vsel %vm361, %v769, 0.0
      %832 = vadd.xlane.f32.xlu0 %v831
      %v833 = vpop.xlane.xlu0 %832
      %v834 = vsel %vm361, %v770, 0.0
      %835 = vadd.xlane.f32.xlu0 %v834
      %v836 = vpop.xlane.xlu0 %835
      %v837 = vsel %vm361, %v771, 0.0
      %838 = vadd.xlane.f32.xlu0 %v837
      %v839 = vpop.xlane.xlu0 %838
      %v840 = vsel %vm361, %v772, 0.0
      %841 = vadd.xlane.f32.xlu0 %v840
      %v842 = vpop.xlane.xlu0 %841
      %v843 = vsel %vm361, %v773, 0.0
      %844 = vadd.xlane.f32.xlu0 %v843
      %v845 = vpop.xlane.xlu0 %844
      %v846 = vsel %vm361, %v774, 0.0
      %847 = vadd.xlane.f32.xlu0 %v846
      %v848 = vpop.xlane.xlu0 %847
      %v849 = vsel %vm361, %v775, 0.0
      %850 = vadd.xlane.f32.xlu0 %v849
      %v851 = vpop.xlane.xlu0 %850
      %v852 = vsel %vm361, %v776, 0.0
      %853 = vadd.xlane.f32.xlu0 %v852
      %v854 = vpop.xlane.xlu0 %853
      %v855 = vsel %vm361, %v777, 0.0
      %856 = vadd.xlane.f32.xlu0 %v855
      %v857 = vpop.xlane.xlu0 %856
      %v858 = vsel %vm361, %v778, 0.0
      %859 = vadd.xlane.f32.xlu0 %v858
      %v860 = vpop.xlane.xlu0 %859
      %v861 = vsel %vm361, %v779, 0.0
      %862 = vadd.xlane.f32.xlu0 %v861
      %v863 = vpop.xlane.xlu0 %862
      %v864 = vsel %vm361, %v780, 0.0
      %865 = vadd.xlane.f32.xlu0 %v864
      %v866 = vpop.xlane.xlu0 %865
      %v867 = vsel %vm361, %v781, 0.0
      %868 = vadd.xlane.f32.xlu0 %v867
      %v869 = vpop.xlane.xlu0 %868
      %v870 = vsel %vm361, %v782, 0.0
      %871 = vadd.xlane.f32.xlu0 %v870
      %v872 = vpop.xlane.xlu0 %871
      %v873 = vsel %vm361, %v783, 0.0
      %874 = vadd.xlane.f32.xlu0 %v873
      %v875 = vpop.xlane.xlu0 %874
      %v876 = vsel %vm361, %v784, 0.0
      %877 = vadd.xlane.f32.xlu0 %v876
      %v878 = vpop.xlane.xlu0 %877
      %v879 = vsel %vm361, %v785, 0.0
      %880 = vadd.xlane.f32.xlu0 %v879
      %v881 = vpop.xlane.xlu0 %880
      %v882 = vperm.slane %v231, 0
      %v883 = vadd.f32 %v788, %v882
      %v884 = vadd.f32 %v791, %v882
      %v885 = vadd.f32 %v794, %v882
      %v886 = vadd.f32 %v797, %v882
      %v887 = vadd.f32 %v800, %v882
      %v888 = vadd.f32 %v803, %v882
      %v889 = vadd.f32 %v806, %v882
      %v890 = vadd.f32 %v809, %v882
      %v891 = vadd.f32 %v812, %v882
      %v892 = vadd.f32 %v815, %v882
      %v893 = vadd.f32 %v818, %v882
      %v894 = vadd.f32 %v821, %v882
      %v895 = vadd.f32 %v824, %v882
      %v896 = vadd.f32 %v827, %v882
      %v897 = vadd.f32 %v830, %v882
      %v898 = vadd.f32 %v833, %v882
      %v899 = vadd.f32 %v836, %v882
      %v900 = vadd.f32 %v839, %v882
      %v901 = vadd.f32 %v842, %v882
      %v902 = vadd.f32 %v845, %v882
      %v903 = vadd.f32 %v848, %v882
      %v904 = vadd.f32 %v851, %v882
      %v905 = vadd.f32 %v854, %v882
      %v906 = vadd.f32 %v857, %v882
      %v907 = vadd.f32 %v860, %v882
      %v908 = vadd.f32 %v863, %v882
      %v909 = vadd.f32 %v866, %v882
      %v910 = vadd.f32 %v869, %v882
      %v911 = vadd.f32 %v872, %v882
      %v912 = vadd.f32 %v875, %v882
      %v913 = vadd.f32 %v878, %v882
      %v914 = vadd.f32 %v881, %v882
      %vm915 = vcmask 7168
      %916 = vst.msk [vmem:[%s226] sm:$0xff] %vm915, %v883
      %917 = vst.msk [vmem:[%s226 + $0x8] sm:$0xff] %vm915, %v884
      %918 = vst.msk [vmem:[%s226 + $0x10] sm:$0xff] %vm915, %v885
      %919 = vst.msk [vmem:[%s226 + $0x18] sm:$0xff] %vm915, %v886
      %920 = vst.msk [vmem:[%s226 + $0x20] sm:$0xff] %vm915, %v887
      %921 = vst.msk [vmem:[%s226 + $0x28] sm:$0xff] %vm915, %v888
      %922 = vst.msk [vmem:[%s226 + $0x30] sm:$0xff] %vm915, %v889
      %923 = vst.msk [vmem:[%s226 + $0x38] sm:$0xff] %vm915, %v890
      %924 = vst.msk [vmem:[%s226 + $0x40] sm:$0xff] %vm915, %v891
      %925 = vst.msk [vmem:[%s226 + $0x48] sm:$0xff] %vm915, %v892
      %926 = vst.msk [vmem:[%s226 + $0x50] sm:$0xff] %vm915, %v893
      %927 = vst.msk [vmem:[%s226 + $0x58] sm:$0xff] %vm915, %v894
      %928 = vst.msk [vmem:[%s226 + $0x60] sm:$0xff] %vm915, %v895
      %929 = vst.msk [vmem:[%s226 + $0x68] sm:$0xff] %vm915, %v896
      %930 = vst.msk [vmem:[%s226 + $0x70] sm:$0xff] %vm915, %v897
      %931 = vst.msk [vmem:[%s226 + $0x78] sm:$0xff] %vm915, %v898
      %932 = vst.msk [vmem:[%s226 + $0x80] sm:$0xff] %vm915, %v899
      %933 = vst.msk [vmem:[%s226 + $0x88] sm:$0xff] %vm915, %v900
      %934 = vst.msk [vmem:[%s226 + $0x90] sm:$0xff] %vm915, %v901
      %935 = vst.msk [vmem:[%s226 + $0x98] sm:$0xff] %vm915, %v902
      %936 = vst.msk [vmem:[%s226 + $0xa0] sm:$0xff] %vm915, %v903
      %937 = vst.msk [vmem:[%s226 + $0xa8] sm:$0xff] %vm915, %v904
      %938 = vst.msk [vmem:[%s226 + $0xb0] sm:$0xff] %vm915, %v905
      %939 = vst.msk [vmem:[%s226 + $0xb8] sm:$0xff] %vm915, %v906
      %940 = vst.msk [vmem:[%s226 + $0xc0] sm:$0xff] %vm915, %v907
      %941 = vst.msk [vmem:[%s226 + $0xc8] sm:$0xff] %vm915, %v908
      %942 = vst.msk [vmem:[%s226 + $0xd0] sm:$0xff] %vm915, %v909
      %943 = vst.msk [vmem:[%s226 + $0xd8] sm:$0xff] %vm915, %v910
      %944 = vst.msk [vmem:[%s226 + $0xe0] sm:$0xff] %vm915, %v911
      %945 = vst.msk [vmem:[%s226 + $0xe8] sm:$0xff] %vm915, %v912
      %946 = vst.msk [vmem:[%s226 + $0xf0] sm:$0xff] %vm915, %v913
      %947 = vst.msk [vmem:[%s226 + $0xf8] sm:$0xff] %vm915, %v914
      %s948 = smul.u32 32, %s16
      %p949 = scmp.lt.s32.totalorder %s948, 63
      %s950 = scalar_select %p949, %s948, 63
      %s951 = smul.addr %s950, 8
      %s952 = scalar_lea.vmem %s5, %s951
      // Predicated region
      $region41: #{tpu_custom_call.1} parent=39 // pred_check
        %p953 = pneg %p144
      $region42: #{tpu_custom_call.1} parent=39 // pred_check_branch
        %955 = sbr.rel (%p953) target = $region44
      $region43: #{tpu_custom_call.1} parent=39 // pred_region
        %s956 = smul.u32 32, %s16
      $region44: #{tpu_custom_call.1} parent=39 // pred_fallthru
        _
    $region40: #{tpu_custom_call.1} parent=5 // pred_fallthru
      _
    %p957 = scmp.le.s32.totalorder 2, %s11
    // Predicated region
    $region45: #{tpu_custom_call.1} parent=5 // pred_check
      %p958 = pneg %p957
    $region46: #{tpu_custom_call.1} parent=5 // pred_check_branch
      %960 = sbr.rel (%p958) target = $region48
    $region47: #{tpu_custom_call.1} parent=5 // pred_region
      %s961 = ssub.s32 %s11, 2
      // Predicated region
      $region49: #{tpu_custom_call.1} parent=47 // pred_check
        %p962 = pneg %p150
      $region50: #{tpu_custom_call.1} parent=47 // pred_check_branch
        %964 = sbr.rel (%p962) target = $region52
      $region51: #{tpu_custom_call.1} parent=47 // pred_region
        %s965 = smul.u32 32, %s17
        %p966 = scmp.lt.s32.totalorder %s965, 63
        %s967 = scalar_select %p966, %s965, 63
        %s968 = smul.addr %s967, 8
        %s969 = scalar_lea.vmem %s5, %s968
      $region52: #{tpu_custom_call.1} parent=47 // pred_fallthru
        _
    $region48: #{tpu_custom_call.1} parent=5 // pred_fallthru
      _
  $region6: #{tpu_custom_call.1} parent=0 // loop_footer
    %s15 = sadd.s32 1, %s11
  $region7: #{tpu_custom_call.1} parent=0 // loop_footer_branch
    %10 = sbr.rel target = $region3
  $region8: #{tpu_custom_call.1} parent=0 // loop_exit
    _

</llo_original>
